<compile_context>
chip_gen: v6e
topology: v6e:2x2x1
jax: 0.10.0
libtpu: 0.0.40
codegen_flags: <defaults>
</compile_context>

<pallas_src>
import functools

import jax
import jax.numpy as jnp
from jax import lax
from jax.experimental import pallas as pl
from jax.experimental.pallas import tpu as pltpu

_INV_SQRT2 = 0.7071067811865476


def _round_up(x, m):
    return ((x + m - 1) // m) * m


# ---------------------------------------------------------------------------
# Kernel
# ---------------------------------------------------------------------------
def _mlp_kernel(x_ref, wfc_ref, bfc_ref, wproj_ref, bproj_ref, o_ref, *scratch):
    """grid = (M tiles "parallel", O tiles "parallel", H tiles "arbitrary").

    x_ref:     (tm, Wp)   input row tile (constant across n, j)
    wfc_ref:   (Wp, th)   c_fc weight tile (transposed layout)
    bfc_ref:   (1,  th)   c_fc bias tile
    wproj_ref: (th, tn)   c_proj weight tile (transposed layout)
    bproj_ref: (1,  tn)   c_proj bias tile
    o_ref:     (tm, tn)   output tile (resident across j)
    scratch:   () for f32 outputs (accumulate directly into o_ref), or
               (acc_ref,) f32 VMEM accumulator for non-f32 outputs.
    """
    acc_ref = scratch[0] if scratch else o_ref
    j = pl.program_id(2)

    @pl.when(j == 0)
    def _():
        acc_ref[...] = jnp.zeros_like(acc_ref)

    # First matmul on the MXU, f32 accumulation (no operand up-cast; bf16
    # operands take the fast bf16 MXU path).
    h = jnp.dot(x_ref[...], wfc_ref[...], preferred_element_type=jnp.float32)
    h = h + bfc_ref[...].astype(jnp.float32)

    # Exact (erf) GELU in f32 — matches nn.GELU() default.
    h = 0.5 * h * (1.0 + lax.erf(h * jnp.float32(_INV_SQRT2)))

    # Second matmul: accumulate the partial contraction over this hidden tile.
    acc_ref[...] += jnp.dot(h.astype(wproj_ref.dtype), wproj_ref[...],
                            preferred_element_type=jnp.float32)

    @pl.when(j == pl.num_programs(2) - 1)
    def _():
        bias = bproj_ref[...].astype(jnp.float32)
        if scratch:
            o_ref[...] = (acc_ref[...] + bias).astype(o_ref.dtype)
        else:
            o_ref[...] += bias


# ---------------------------------------------------------------------------
# Tiling plan / VMEM budgeting
# ---------------------------------------------------------------------------
def _vmem_need(tm, Wp, th, tn, x_bytes, w_bytes, out_bytes, use_acc):
    need = 2 * tm * Wp * x_bytes               # x tile (double-buffered)
    need += 2 * Wp * th * w_bytes              # c_fc weight tile
    need += 2 * th * tn * w_bytes              # c_proj weight tile
    need += 2 * (th + tn) * w_bytes            # bias tiles
    need += 2 * tm * tn * out_bytes            # output tile
    if use_acc:
        need += tm * tn * 4                    # f32 accumulator scratch
    return need


def _vmem_budget_bytes():
    """~75% of detected per-core VMEM (~48 MiB v7x, ~96 MiB v5e/v6e)."""
    cap = 64 * 1024 * 1024                     # conservative fallback (v7x)
    try:
        info = pltpu.get_tpu_info()
        cap = int(getattr(info, "vmem_capacity_bytes", cap)) or cap
    except Exception:
        pass
    return (3 * cap) // 4


def _pick_tm(M, preferred=512):
    """Row tile: large (>=128) for streamed-weight arithmetic intensity, but
    chosen from a candidate set that minimizes padded rows for ragged M."""
    M8 = _round_up(M, 8)
    if M8 <= preferred:
        return M8
    best_tm, best_key = M8, None
    for c in (512, 384, 256, 192, 128):
        if c > preferred:
            continue
        key = (_round_up(M, c), -c)            # least padded rows, then largest
        if best_key is None or key < best_key:
            best_key, best_tm = key, c
    return best_tm


def _plan_tiles(M, Wp, Hp, Op, x_bytes, w_bytes, out_bytes, use_acc, budget):
    tm = _pick_tm(M, preferred=512)

    # Weights-resident fast path: both weight matrices live in VMEM once and
    # are reused by every row tile (hidden/output grid axes collapse to 1).
    if _vmem_need(tm, Wp, Hp, Op, x_bytes, w_bytes, out_bytes, use_acc) <= budget:
        th, tn = Hp, Op
    else:
        # Streamed weights: tile the hidden (reduction) and output dims.
        th_cands = [c for c in (512, 256, 128) if Hp % c == 0] or [Hp]
        tn_cands = ([Op] if Op <= 1024 else []) + \
                   [c for c in (1024, 512, 256, 128) if c < Op and Op % c == 0]
        tn_cands = tn_cands or [Op]
        ti = ni = 0
        th, tn = th_cands[ti], tn_cands[ni]
        while _vmem_need(tm, Wp, th, tn, x_bytes, w_bytes, out_bytes,
                         use_acc) > budget:
            if tm > 128:
                tm = max(128, _round_up(tm // 2, 8))
            elif ni + 1 < len(tn_cands):
                ni += 1
                tn = tn_cands[ni]
            elif ti + 1 < len(th_cands):
                ti += 1
                th = th_cands[ti]
            else:
                break                           # best effort

    # v7x has 2 TensorCores: expose >=2 "parallel" steps whenever splittable.
    if (_round_up(M, tm) // tm) * (Op // tn) < 2 and M > 8:
        tm = _round_up((M + 1) // 2, 8)

    return tm, th, tn


# ---------------------------------------------------------------------------
# Parameter prep (done once, outside the hot path) + launcher
# ---------------------------------------------------------------------------
def prepare_mlp_params(w_fc_t, b_fc, w_proj_t, b_proj, dtype=None):
    """Pad (and optionally cast, e.g. to bf16) the MLP parameters ONCE.

    w_fc_t:   (W, H)  == c_fc.weight.T       b_fc:   (H,)
    w_proj_t: (H, O)  == c_proj.weight.T     b_proj: (O,)
    Returns (wfc, bfc, wpj, bpj, out_features) padded to the (8,128) grid.
    """
    W, H = w_fc_t.shape
    O = w_proj_t.shape[1]
    Wp, Hp, Op = _round_up(W, 128), _round_up(H, 128), _round_up(O, 128)
    if dtype is not None:
        w_fc_t = w_fc_t.astype(dtype)
        b_fc = b_fc.astype(dtype)
        w_proj_t = w_proj_t.astype(dtype)
        b_proj = b_proj.astype(dtype)
    wfc = jnp.pad(w_fc_t, ((0, Wp - W), (0, Hp - H)))
    bfc = jnp.pad(b_fc, (0, Hp - H)).reshape(1, Hp)
    wpj = jnp.pad(w_proj_t, ((0, Hp - H), (0, Op - O)))
    bpj = jnp.pad(b_proj, (0, Op - O)).reshape(1, Op)
    return wfc, bfc, wpj, bpj, O


@functools.partial(
    jax.jit,
    static_argnames=("tm", "th", "tn", "out_features", "vmem_limit_bytes"))
def _mlp_pallas_call(x, wfc, bfc, wpj, bpj, *, tm, th, tn, out_features,
                     vmem_limit_bytes):
    lead = x.shape[:-1]
    W = x.shape[-1]
    Wp, Hp = wfc.shape
    Op = wpj.shape[1]
    M = 1
    for d in lead:
        M *= d
    Mp = _round_up(M, tm)

    x2 = x.reshape(M, W)
    if Mp != M or Wp != W:                      # skip pad when already aligned
        x2 = jnp.pad(x2, ((0, Mp - M), (0, Wp - W)))

    use_acc = x.dtype != jnp.float32            # f32 out: accumulate in o_ref
    grid = (Mp // tm, Op // tn, Hp // th)       # reduction (hidden) axis last

    out_p = pl.pallas_call(
        _mlp_kernel,
        out_shape=jax.ShapeDtypeStruct((Mp, Op), x.dtype),
        grid_spec=pltpu.PrefetchScalarGridSpec(
            num_scalar_prefetch=0,
            grid=grid,
            in_specs=[
                pl.BlockSpec((tm, Wp), lambda i, n, j: (i, 0)),   # x rows
                pl.BlockSpec((Wp, th), lambda i, n, j: (0, j)),   # W_fc^T tile
                pl.BlockSpec((1, th), lambda i, n, j: (0, j)),    # b_fc tile
                pl.BlockSpec((th, tn), lambda i, n, j: (j, n)),   # W_proj^T tile
                pl.BlockSpec((1, tn), lambda i, n, j: (0, n)),    # b_proj tile
            ],
            out_specs=pl.BlockSpec((tm, tn), lambda i, n, j: (i, n)),
            scratch_shapes=(
                [pltpu.VMEM((tm, tn), jnp.float32)] if use_acc else []),
        ),
        compiler_params=pltpu.CompilerParams(
            dimension_semantics=("parallel", "parallel", "arbitrary"),
            vmem_limit_bytes=vmem_limit_bytes,
        ),
    )(x2, wfc, bfc, wpj, bpj)

    out = out_p
    if Mp != M or Op != out_features:           # skip slice when aligned
        out = out[:M, :out_features]
    return out.reshape(*lead, out_features)


def mlp_pallas(x, params):
    """x: (..., width) -> (..., out_features). `params` from prepare_mlp_params."""
    wfc, bfc, wpj, bpj, out_features = params
    Wp, Hp = wfc.shape
    Op = wpj.shape[1]
    M = 1
    for d in x.shape[:-1]:
        M *= d
    x_bytes = jnp.dtype(x.dtype).itemsize
    w_bytes = jnp.dtype(wfc.dtype).itemsize
    use_acc = x.dtype != jnp.float32
    budget = _vmem_budget_bytes()
    tm, th, tn = _plan_tiles(M, Wp, Hp, Op, x_bytes, w_bytes, x_bytes,
                             use_acc, budget)
    return _mlp_pallas_call(x, wfc, bfc, wpj, bpj, tm=tm, th=th, tn=tn,
                            out_features=out_features,
                            vmem_limit_bytes=budget)


# ---------------------------------------------------------------------------
# Reference + demo
# ---------------------------------------------------------------------------
def _mlp_reference(x, w_fc_t, b_fc, w_proj_t, b_proj):
    h = jnp.dot(x, w_fc_t) + b_fc
    h = 0.5 * h * (1.0 + lax.erf(h * jnp.float32(_INV_SQRT2)))
    return jnp.dot(h, w_proj_t) + b_proj


def _make_params(key, width, hidden, out_width):
    kwf, kbf, kwp, kbp = jax.random.split(key, 4)
    bound_fc = (1.0 / width) ** 0.5
    w_fc_t = jax.random.uniform(kwf, (width, hidden), jnp.float32,
                                -bound_fc, bound_fc)
    b_fc = jax.random.uniform(kbf, (hidden,), jnp.float32, -bound_fc, bound_fc)
    bound_pj = (1.0 / hidden) ** 0.5
    w_proj_t = jax.random.uniform(kwp, (hidden, out_width), jnp.float32,
                                  -bound_pj, bound_pj)
    b_proj = jax.random.uniform(kbp, (out_width,), jnp.float32,
                                -bound_pj, bound_pj)
    return w_fc_t, b_fc, w_proj_t, b_proj


if __name__ == "__main__":
    key = jax.random.PRNGKey(0)

    # Case 1: shapes consistent with the module: width=32, expand_ratio=4.
    width, expand_ratio = 32, 4
    hidden = width * expand_ratio          # 128
    out_width = width                      # output_width=None -> width
    batch, seq = 2, 8

    k1, k2, kx1, kx2 = jax.random.split(key, 4)
    w_fc_t, b_fc, w_proj_t, b_proj = _make_params(k1, width, hidden, out_width)
    x = jax.random.normal(kx1, (batch, seq, width), dtype=jnp.float32)

    params = prepare_mlp_params(w_fc_t, b_fc, w_proj_t, b_proj)
    y = jax.block_until_ready(mlp_pallas(x, params))
    y_ref = _mlp_reference(x, w_fc_t, b_fc, w_proj_t, b_proj)
    assert y.shape == (batch, seq, out_width)
    assert jnp.allclose(y, y_ref, atol=1e-4, rtol=1e-4), "mismatch (case 1)"

    # Case 2: awkward, non-tile-divisible shapes (exercises padding paths).
    width2, hidden2, out2 = 40, 160, 24
    batch2, seq2 = 2, 9
    w_fc_t2, b_fc2, w_proj_t2, b_proj2 = _make_params(k2, width2, hidden2, out2)
    x2 = jax.random.normal(kx2, (batch2, seq2, width2), dtype=jnp.float32)

    params2 = prepare_mlp_params(w_fc_t2, b_fc2, w_proj_t2, b_proj2)
    y2 = jax.block_until_ready(mlp_pallas(x2, params2))
    y2_ref = _mlp_reference(x2, w_fc_t2, b_fc2, w_proj_t2, b_proj2)
    assert y2.shape == (batch2, seq2, out2)
    assert jnp.allclose(y2, y2_ref, atol=1e-4, rtol=1e-4), "mismatch (case 2)"

    # Case 3: bf16 operands (bf16 MXU path + f32 accumulator scratch).
    params_bf16 = prepare_mlp_params(w_fc_t, b_fc, w_proj_t, b_proj,
                                     dtype=jnp.bfloat16)
    y3 = jax.block_until_ready(mlp_pallas(x.astype(jnp.bfloat16), params_bf16))
    assert y3.shape == (batch, seq, out_width)
    assert jnp.allclose(y3.astype(jnp.float32), y_ref, atol=5e-2, rtol=5e-2), \
        "mismatch (case 3)"

    print("KERNEL_OK")
</pallas_src>

<mosaic_0001>
module attributes {stable_mosaic.version = 11 : i64} {
  func.func @_mlp_kernel(%arg0: i32, %arg1: i32, %arg2: i32, %arg3: memref<8x128xf32, #tpu.memory_space<vmem>>, %arg4: memref<128x128xf32, #tpu.memory_space<vmem>>, %arg5: memref<1x128xf32, #tpu.memory_space<vmem>>, %arg6: memref<128x128xf32, #tpu.memory_space<vmem>>, %arg7: memref<1x128xf32, #tpu.memory_space<vmem>>, %arg8: memref<8x128xf32, #tpu.memory_space<vmem>>) attributes {dimension_semantics = [#tpu.dimension_semantics<parallel>, #tpu.dimension_semantics<parallel>, #tpu.dimension_semantics<arbitrary>], iteration_bounds = array<i64: 2, 1, 1>, scalar_prefetch = 0 : i64, scratch_operands = 0 : i64, tpu.core_type = #tpu.core_type<tc>, window_params = [{transform_indices = @transform_0, window_bounds = array<i64: 8, 128>}, {transform_indices = @transform_1, window_bounds = array<i64: 128, 128>}, {transform_indices = @transform_2, window_bounds = array<i64: 1, 128>}, {transform_indices = @transform_3, window_bounds = array<i64: 128, 128>}, {transform_indices = @transform_4, window_bounds = array<i64: 1, 128>}, {transform_indices = @transform_5, window_bounds = array<i64: 8, 128>}]} {
    %c0_i32 = arith.constant 0 : i32
    %0 = arith.cmpi eq, %arg2, %c0_i32 : i32
    %1 = arith.extui %0 : i1 to i32
    %c0_i32_0 = arith.constant 0 : i32
    %2 = arith.cmpi ne, %1, %c0_i32_0 : i32
    scf.if %2 {
      %cst_18 = arith.constant 0.000000e+00 : f32
      %25 = vector.broadcast %cst_18 : f32 to vector<8x128xf32>
      %c0_19 = arith.constant 0 : index
      %c0_20 = arith.constant 0 : index
      %26 = vector.load %arg8[%c0_19, %c0_20] : memref<8x128xf32, #tpu.memory_space<vmem>>, vector<8x128xf32>
      tpu.vector_store %arg8[%c0_19, %c0_20], %25 {strides = array<i32>} : memref<8x128xf32, #tpu.memory_space<vmem>>, vector<8x128xf32>,
    } else {
    }
    %c0 = arith.constant 0 : index
    %c0_1 = arith.constant 0 : index
    %3 = vector.load %arg3[%c0, %c0_1] : memref<8x128xf32, #tpu.memory_space<vmem>>, vector<8x128xf32>
    %c0_2 = arith.constant 0 : index
    %c0_3 = arith.constant 0 : index
    %4 = vector.load %arg4[%c0_2, %c0_3] : memref<128x128xf32, #tpu.memory_space<vmem>>, vector<128x128xf32>
    %cst = arith.constant dense<0.000000e+00> : vector<8x128xf32>
    %5 = tpu.matmul %3, %4, %cst {dimension_numbers = #tpu.dot_dimension_numbers<[1], [0], [0], [1], [0, 0, 1, 1], [], []>} : vector<8x128xf32>, vector<128x128xf32>, vector<8x128xf32> -> vector<8x128xf32>
    %c0_4 = arith.constant 0 : index
    %c0_5 = arith.constant 0 : index
    %6 = vector.load %arg5[%c0_4, %c0_5] : memref<1x128xf32, #tpu.memory_space<vmem>>, vector<1x128xf32>
    %7 = vector.broadcast %6 : vector<1x128xf32> to vector<8x128xf32>
    %8 = arith.addf %5, %7 : vector<8x128xf32>
    %cst_6 = arith.constant 5.000000e-01 : f32
    %9 = vector.broadcast %cst_6 : f32 to vector<8x128xf32>
    %10 = arith.mulf %9, %8 : vector<8x128xf32>
    %cst_7 = arith.constant 0.707106769 : f32
    %11 = vector.broadcast %cst_7 : f32 to vector<8x128xf32>
    %12 = arith.mulf %8, %11 : vector<8x128xf32>
    %13 = math.erf %12 : vector<8x128xf32>
    %cst_8 = arith.constant 1.000000e+00 : f32
    %14 = vector.broadcast %cst_8 : f32 to vector<8x128xf32>
    %15 = arith.addf %14, %13 : vector<8x128xf32>
    %16 = arith.mulf %10, %15 : vector<8x128xf32>
    %c0_9 = arith.constant 0 : index
    %c0_10 = arith.constant 0 : index
    %17 = vector.load %arg8[%c0_9, %c0_10] : memref<8x128xf32, #tpu.memory_space<vmem>>, vector<8x128xf32>
    %c0_11 = arith.constant 0 : index
    %c0_12 = arith.constant 0 : index
    %18 = vector.load %arg6[%c0_11, %c0_12] : memref<128x128xf32, #tpu.memory_space<vmem>>, vector<128x128xf32>
    %cst_13 = arith.constant dense<0.000000e+00> : vector<8x128xf32>
    %19 = tpu.matmul %16, %18, %cst_13 {dimension_numbers = #tpu.dot_dimension_numbers<[1], [0], [0], [1], [0, 0, 1, 1], [], []>} : vector<8x128xf32>, vector<128x128xf32>, vector<8x128xf32> -> vector<8x128xf32>
    %20 = arith.addf %17, %19 : vector<8x128xf32>
    %c0_14 = arith.constant 0 : index
    %c0_15 = arith.constant 0 : index
    %21 = vector.load %arg8[%c0_14, %c0_15] : memref<8x128xf32, #tpu.memory_space<vmem>>, vector<8x128xf32>
    tpu.vector_store %arg8[%c0_14, %c0_15], %20 {strides = array<i32>} : memref<8x128xf32, #tpu.memory_space<vmem>>, vector<8x128xf32>,
    %c0_i32_16 = arith.constant 0 : i32
    %22 = arith.cmpi eq, %arg2, %c0_i32_16 : i32
    %23 = arith.extui %22 : i1 to i32
    %c0_i32_17 = arith.constant 0 : i32
    %24 = arith.cmpi ne, %23, %c0_i32_17 : i32
    scf.if %24 {
      %c0_18 = arith.constant 0 : index
      %c0_19 = arith.constant 0 : index
      %25 = vector.load %arg7[%c0_18, %c0_19] : memref<1x128xf32, #tpu.memory_space<vmem>>, vector<1x128xf32>
      %c0_20 = arith.constant 0 : index
      %c0_21 = arith.constant 0 : index
      %26 = vector.load %arg8[%c0_20, %c0_21] : memref<8x128xf32, #tpu.memory_space<vmem>>, vector<8x128xf32>
      %27 = vector.broadcast %25 : vector<1x128xf32> to vector<8x128xf32>
      %28 = arith.addf %26, %27 : vector<8x128xf32>
      %c0_22 = arith.constant 0 : index
      %c0_23 = arith.constant 0 : index
      %29 = vector.load %arg8[%c0_22, %c0_23] : memref<8x128xf32, #tpu.memory_space<vmem>>, vector<8x128xf32>
      tpu.vector_store %arg8[%c0_22, %c0_23], %28 {strides = array<i32>} : memref<8x128xf32, #tpu.memory_space<vmem>>, vector<8x128xf32>,
    } else {
    }
    return
  }
  func.func @transform_0(%arg0: i32, %arg1: i32, %arg2: i32) -> (i32, i32) {
    %c0_i32 = arith.constant 0 : i32
    %c0_i32_0 = arith.constant 0 : i32
    return %arg0, %c0_i32 : i32, i32
  }
  func.func @transform_1(%arg0: i32, %arg1: i32, %arg2: i32) -> (i32, i32) {
    %c0_i32 = arith.constant 0 : i32
    %c0_i32_0 = arith.constant 0 : i32
    return %c0_i32, %arg2 : i32, i32
  }
  func.func @transform_2(%arg0: i32, %arg1: i32, %arg2: i32) -> (i32, i32) {
    %c0_i32 = arith.constant 0 : i32
    %c0_i32_0 = arith.constant 0 : i32
    return %c0_i32, %arg2 : i32, i32
  }
  func.func @transform_3(%arg0: i32, %arg1: i32, %arg2: i32) -> (i32, i32) {
    %c0_i32 = arith.constant 0 : i32
    return %arg2, %arg1 : i32, i32
  }
  func.func @transform_4(%arg0: i32, %arg1: i32, %arg2: i32) -> (i32, i32) {
    %c0_i32 = arith.constant 0 : i32
    %c0_i32_0 = arith.constant 0 : i32
    return %c0_i32, %arg1 : i32, i32
  }
  func.func @transform_5(%arg0: i32, %arg1: i32, %arg2: i32) -> (i32, i32) {
    %c0_i32 = arith.constant 0 : i32
    return %arg0, %arg1 : i32, i32
  }
}

</mosaic_0001>

<llo_original>
// kernel: _mlp_pallas_call.1
$region0: #{_mlp_pallas_call.1}
  #allocation0 [shape = 'u32[]', space=smem, size = 0x4, offset = 0x4, fixed_abs, tag = 'smem constant byte address 0x4 - core index']
  #allocation1 [shape = 'u32[144,128]{1,0:T(1,128)}', space=vmem, size = 0x12000, scoped, tag = 'internal scratch']
  %s0 = inlined_call_operand.vmem [shape: f32[16,128], index: 0, kind: input, shape index: {}]
  %s1 = inlined_call_operand.hbm [shape: f32[128,128], index: 1, kind: input, shape index: {}]
  %s2 = inlined_call_operand.vmem [shape: f32[1,128], index: 2, kind: input, shape index: {}]
  %s3 = inlined_call_operand.hbm [shape: f32[128,128], index: 3, kind: input, shape index: {}]
  %s4 = inlined_call_operand.vmem [shape: f32[1,128], index: 4, kind: input, shape index: {}]
  %s5 = inlined_call_operand.vmem [shape: f32[16,128], index: 5, kind: output, shape index: {}]
  %s6 = sld [smem:[#allocation0]]
  $region69: #{_mlp_pallas_call.1} parent=0
    _
  %s8 = ssub.s32 1, %s6
  %s9 = scalar_select 0, %s8, %s6
  $region1: #{_mlp_pallas_call.1} parent=0
    #allocation2 [shape = 'u8[65536]{0}', space=vmem, size = 0x10000, scoped, tag = 'input window, operand 1, single buffered']
    #allocation3 [shape = 's32[2]{0}', space=sflag, size = 0x8, scoped, tag = 'scoped memory for _mlp_pallas_call.1']
    #allocation4 [shape = 'u8[65536]{0}', space=vmem, size = 0x10000, scoped, tag = 'input window, operand 3, single buffered']
    #allocation5 [shape = 's32[1]{0}', space=sflag, size = 0x4, scoped, tag = 'scoped memory for _mlp_pallas_call.1']
    %10 = vsyncpa [#allocation3], 0
    %11 = vsyncpa [#allocation5], 0
    loop: start=0, step=1, limit=4
    $region2: #{_mlp_pallas_call.1} parent=1 // loop_pre_header
      _
    $region3: #{_mlp_pallas_call.1} parent=1 // loop_header
      %s13 = sphi 0, %s17
      %p14 = scmp.ge.s32.totalorder %s13, 4
      %s20 = sphi 0, %s39
      %s21 = sphi 0, %s35
      %s22 = sphi 0, %s31
      %s23 = sphi 0, %s20
      %s24 = sphi 0, %s21
      %s25 = sphi 0, %s22
      %s26 = sphi 0, %s23
      %s27 = sphi 0, %s24
      %s28 = sphi 0, %s25
      %s42 = sphi 0, %s44
      %s45 = sphi 0, %s42
      %s46 = sphi 0, %s45
      %s62 = sphi 0, %s46
      %s68 = sphi 0, %s70
      %s71 = sphi 0, %s68
      %s72 = sphi 0, %s71
      %s88 = sphi 0, %s72
      %s94 = sphi 0, %s96
      %s97 = sphi 0, %s94
      %s98 = sphi 0, %s97
      %s114 = sphi 0, %s98
      %s122 = sphi 0, %s124
      %s125 = sphi 0, %s122
      %s126 = sphi 0, %s125
      %s142 = sphi 0, %s126
      %s148 = sphi 0, %s150
      %s151 = sphi 0, %s148
      %s152 = sphi 0, %s151
      %s168 = sphi 0, %s152
      %s176 = sphi 0, %s178
      %s179 = sphi 0, %s176
      %s180 = sphi 0, %s179
      %s196 = sphi 0, %s180
    $region4: #{_mlp_pallas_call.1} parent=1 // loop_header_branch
      %16 = sbr.rel (%p14) target = $region8
    $region5: #{_mlp_pallas_call.1} parent=1 // loop_body
      %s18 = ssub.s32 %s13, 1
      %s19 = ssub.s32 %s13, 2
      %s29 = sadd.s32 1, %s22
      %p30 = scmp.ge.s32.totalorder %s29, 1
      %s31 = scalar_select %p30, 0, %s29
      %s32 = sadd.s32 1, %s21
      %s33 = scalar_select %p30, %s32, %s21
      %p34 = scmp.ge.s32.totalorder %s33, 1
      %s35 = scalar_select %p34, 0, %s33
      %s36 = sadd.s32 1, %s20
      %s37 = scalar_select %p34, %s36, %s20
      %p38 = scmp.ge.s32.totalorder %s37, 2
      %s39 = scalar_select %p38, 0, %s37
      %s40 = ssub.s32 %s20, %s39
      %p41 = scmp.eq.s32.totalorder %s40, 0
      %s43 = sadd.s32 %s42, 1
      %s44 = scalar_select %p41, %s42, %s43
      %p47 = pneg %p41
      %p48 = scmp.eq.s32.totalorder %s13, 1
      %p49 = por %p47, %p48
      %p50 = scmp.ne.s32.totalorder %s42, %s45
      %p51 = scmp.eq.s32.totalorder %s13, 0
      %p52 = por %p50, %p51
      %p53 = scmp.ne.s32.totalorder %s42, %s45
      %p54 = scmp.eq.s32.totalorder %s18, 1
      %p55 = por %p53, %p54
      %p56 = scmp.ne.s32.totalorder %s45, %s46
      %p57 = scmp.eq.s32.totalorder %s18, 0
      %p58 = por %p56, %p57
      %p59 = scmp.ne.s32.totalorder %s45, %s46
      %p60 = scmp.eq.s32.totalorder %s19, 1
      %p61 = por %p59, %p60
      %p63 = scmp.ne.s32.totalorder %s46, %s62
      %p64 = scmp.eq.s32.totalorder %s19, 0
      %p65 = por %p63, %p64
      %s66 = ssub.s32 %s22, %s31
      %p67 = scmp.eq.s32.totalorder %s66, 0
      %s69 = sadd.s32 %s68, 1
      %s70 = scalar_select %p67, %s68, %s69
      %p73 = pneg %p67
      %p74 = scmp.eq.s32.totalorder %s13, 1
      %p75 = por %p73, %p74
      %p76 = scmp.ne.s32.totalorder %s68, %s71
      %p77 = scmp.eq.s32.totalorder %s13, 0
      %p78 = por %p76, %p77
      %p79 = scmp.ne.s32.totalorder %s68, %s71
      %p80 = scmp.eq.s32.totalorder %s18, 1
      %p81 = por %p79, %p80
      %p82 = scmp.ne.s32.totalorder %s71, %s72
      %p83 = scmp.eq.s32.totalorder %s18, 0
      %p84 = por %p82, %p83
      %p85 = scmp.ne.s32.totalorder %s71, %s72
      %p86 = scmp.eq.s32.totalorder %s19, 1
      %p87 = por %p85, %p86
      %p89 = scmp.ne.s32.totalorder %s72, %s88
      %p90 = scmp.eq.s32.totalorder %s19, 0
      %p91 = por %p89, %p90
      %s92 = ssub.s32 %s22, %s31
      %p93 = scmp.eq.s32.totalorder %s92, 0
      %s95 = sadd.s32 %s94, 1
      %s96 = scalar_select %p93, %s94, %s95
      %p99 = pneg %p93
      %p100 = scmp.eq.s32.totalorder %s13, 1
      %p101 = por %p99, %p100
      %p102 = scmp.ne.s32.totalorder %s94, %s97
      %p103 = scmp.eq.s32.totalorder %s13, 0
      %p104 = por %p102, %p103
      %p105 = scmp.ne.s32.totalorder %s94, %s97
      %p106 = scmp.eq.s32.totalorder %s18, 1
      %p107 = por %p105, %p106
      %p108 = scmp.ne.s32.totalorder %s97, %s98
      %p109 = scmp.eq.s32.totalorder %s18, 0
      %p110 = por %p108, %p109
      %p111 = scmp.ne.s32.totalorder %s97, %s98
      %p112 = scmp.eq.s32.totalorder %s19, 1
      %p113 = por %p111, %p112
      %p115 = scmp.ne.s32.totalorder %s98, %s114
      %p116 = scmp.eq.s32.totalorder %s19, 0
      %p117 = por %p115, %p116
      %s118 = ssub.s32 %s22, %s31
      %s119 = ssub.s32 %s21, %s35
      %s120 = sor.u32 %s118, %s119
      %p121 = scmp.eq.s32.totalorder %s120, 0
      %s123 = sadd.s32 %s122, 1
      %s124 = scalar_select %p121, %s122, %s123
      %p127 = pneg %p121
      %p128 = scmp.eq.s32.totalorder %s13, 1
      %p129 = por %p127, %p128
      %p130 = scmp.ne.s32.totalorder %s122, %s125
      %p131 = scmp.eq.s32.totalorder %s13, 0
      %p132 = por %p130, %p131
      %p133 = scmp.ne.s32.totalorder %s122, %s125
      %p134 = scmp.eq.s32.totalorder %s18, 1
      %p135 = por %p133, %p134
      %p136 = scmp.ne.s32.totalorder %s125, %s126
      %p137 = scmp.eq.s32.totalorder %s18, 0
      %p138 = por %p136, %p137
      %p139 = scmp.ne.s32.totalorder %s125, %s126
      %p140 = scmp.eq.s32.totalorder %s19, 1
      %p141 = por %p139, %p140
      %p143 = scmp.ne.s32.totalorder %s126, %s142
      %p144 = scmp.eq.s32.totalorder %s19, 0
      %p145 = por %p143, %p144
      %s146 = ssub.s32 %s21, %s35
      %p147 = scmp.eq.s32.totalorder %s146, 0
      %s149 = sadd.s32 %s148, 1
      %s150 = scalar_select %p147, %s148, %s149
      %p153 = pneg %p147
      %p154 = scmp.eq.s32.totalorder %s13, 1
      %p155 = por %p153, %p154
      %p156 = scmp.ne.s32.totalorder %s148, %s151
      %p157 = scmp.eq.s32.totalorder %s13, 0
      %p158 = por %p156, %p157
      %p159 = scmp.ne.s32.totalorder %s148, %s151
      %p160 = scmp.eq.s32.totalorder %s18, 1
      %p161 = por %p159, %p160
      %p162 = scmp.ne.s32.totalorder %s151, %s152
      %p163 = scmp.eq.s32.totalorder %s18, 0
      %p164 = por %p162, %p163
      %p165 = scmp.ne.s32.totalorder %s151, %s152
      %p166 = scmp.eq.s32.totalorder %s19, 1
      %p167 = por %p165, %p166
      %p169 = scmp.ne.s32.totalorder %s152, %s168
      %p170 = scmp.eq.s32.totalorder %s19, 0
      %p171 = por %p169, %p170
      %s172 = ssub.s32 %s20, %s39
      %s173 = ssub.s32 %s21, %s35
      %s174 = sor.u32 %s172, %s173
      %p175 = scmp.eq.s32.totalorder %s174, 0
      %s177 = sadd.s32 %s176, 1
      %s178 = scalar_select %p175, %s176, %s177
      %p181 = pneg %p175
      %p182 = scmp.eq.s32.totalorder %s13, 1
      %p183 = por %p181, %p182
      %p184 = scmp.ne.s32.totalorder %s176, %s179
      %p185 = scmp.eq.s32.totalorder %s13, 0
      %p186 = por %p184, %p185
      %p187 = scmp.ne.s32.totalorder %s176, %s179
      %p188 = scmp.eq.s32.totalorder %s18, 1
      %p189 = por %p187, %p188
      %p190 = scmp.ne.s32.totalorder %s179, %s180
      %p191 = scmp.eq.s32.totalorder %s18, 0
      %p192 = por %p190, %p191
      %p193 = scmp.ne.s32.totalorder %s179, %s180
      %p194 = scmp.eq.s32.totalorder %s19, 1
      %p195 = por %p193, %p194
      %p197 = scmp.ne.s32.totalorder %s180, %s196
      %p198 = scmp.eq.s32.totalorder %s19, 0
      %p199 = por %p197, %p198
      %p200 = scmp.le.s32.totalorder 1, %s13
      %p201 = scmp.lt.s32.totalorder %s13, 3
      %p202 = pnand %p200, %p201
      %p203 = pneg %p202
      // Predicated region
      $region9: #{_mlp_pallas_call.1} parent=5 // pred_check
        _
      $region10: #{_mlp_pallas_call.1} parent=5 // pred_check_branch
        %205 = sbr.rel (%p202) target = $region12
      $region11: #{_mlp_pallas_call.1} parent=5 // pred_region
        %s206 = ssub.s32 %s13, 1
        // Predicated region
        $region13: #{_mlp_pallas_call.1} parent=11 // pred_check
          %p207 = pneg %p84
        $region14: #{_mlp_pallas_call.1} parent=11 // pred_check_branch
          %209 = sbr.rel (%p207) target = $region16
        $region15: #{_mlp_pallas_call.1} parent=11 // pred_region
          %s211 = ssub.s32 2048, 2048
          %212 = vsyncadd [#allocation3], %s211
          %s213 = smul.addr %s25, 128
          %s214 = scalar_lea.hbm %s1, %s213
          %s215 = sshll.u32 [#allocation2], 4
          %s216 = int_to_ptr.vmem [resolvable:$true] %s215
          %221 = dma.hbm_to_vmem [thread:$0]  %s214, 2048, %s216, [#allocation3], 128, 128, 8
        $region16: #{_mlp_pallas_call.1} parent=11 // pred_fallthru
          _
        // Predicated region
        $region17: #{_mlp_pallas_call.1} parent=11 // pred_check
          %p222 = pneg %p110
        $region18: #{_mlp_pallas_call.1} parent=11 // pred_check_branch
          %224 = sbr.rel (%p222) target = $region20
        $region19: #{_mlp_pallas_call.1} parent=11 // pred_region
          %p225 = scmp.lt.s32.totalorder %s25, 0
          %s226 = scalar_select %p225, %s25, 0
          %s227 = scalar_lea.vmem %s2, %s226
        $region20: #{_mlp_pallas_call.1} parent=11 // pred_fallthru
          _
        // Predicated region
        $region21: #{_mlp_pallas_call.1} parent=11 // pred_check
          %p228 = pneg %p138
        $region22: #{_mlp_pallas_call.1} parent=11 // pred_check_branch
          %230 = sbr.rel (%p228) target = $region24
        $region23: #{_mlp_pallas_call.1} parent=11 // pred_region
          %s231 = smul.u32 16, %s25
          %s233 = ssub.s32 2048, 2048
          %234 = vsyncadd [#allocation5], %s233
          %s235 = sadd.s32 %s24, %s231
          %s236 = smul.addr %s235, 128
          %s237 = scalar_lea.hbm %s3, %s236
          %s238 = sshll.u32 [#allocation4], 4
          %s239 = int_to_ptr.vmem [resolvable:$true] %s238
          %244 = dma.hbm_to_vmem [thread:$0]  %s237, 2048, %s239, [#allocation5], 128, 128, 8
        $region24: #{_mlp_pallas_call.1} parent=11 // pred_fallthru
          _
        // Predicated region
        $region25: #{_mlp_pallas_call.1} parent=11 // pred_check
          %p245 = pneg %p164
        $region26: #{_mlp_pallas_call.1} parent=11 // pred_check_branch
          %247 = sbr.rel (%p245) target = $region28
        $region27: #{_mlp_pallas_call.1} parent=11 // pred_region
          %p248 = scmp.lt.s32.totalorder %s24, 0
          %s249 = scalar_select %p248, %s24, 0
          %s250 = scalar_lea.vmem %s4, %s249
        $region28: #{_mlp_pallas_call.1} parent=11 // pred_fallthru
          _
      $region12: #{_mlp_pallas_call.1} parent=5 // pred_fallthru
        _
      %p251 = scmp.lt.s32.totalorder %s13, 2
      // Predicated region
      $region29: #{_mlp_pallas_call.1} parent=5 // pred_check
        %p252 = pneg %p251
      $region30: #{_mlp_pallas_call.1} parent=5 // pred_check_branch
        %254 = sbr.rel (%p252) target = $region32
      $region31: #{_mlp_pallas_call.1} parent=5 // pred_region
        // Predicated region
        $region33: #{_mlp_pallas_call.1} parent=31 // pred_check
          %p255 = pneg %p52
        $region34: #{_mlp_pallas_call.1} parent=31 // pred_check_branch
          %257 = sbr.rel (%p255) target = $region36
        $region35: #{_mlp_pallas_call.1} parent=31 // pred_region
          %p258 = scmp.lt.s32.totalorder %s20, 1
          %s259 = scalar_select %p258, %s20, 1
          %s260 = smul.addr %s259, 8
          %s261 = scalar_lea.vmem %s0, %s260
        $region36: #{_mlp_pallas_call.1} parent=31 // pred_fallthru
          _
      $region32: #{_mlp_pallas_call.1} parent=5 // pred_fallthru
        _
      %p262 = scmp.le.s32.totalorder 1, %s13
      %p263 = scmp.lt.s32.totalorder %s13, 3
      %p264 = pnand %p262, %p263
      %p265 = pneg %p264
      // Predicated region
      $region37: #{_mlp_pallas_call.1} parent=5 // pred_check
        _
      $region38: #{_mlp_pallas_call.1} parent=5 // pred_check_branch
        %267 = sbr.rel (%p264) target = $region40
      $region39: #{_mlp_pallas_call.1} parent=5 // pred_region
        %s268 = ssub.s32 %s13, 1
        // Predicated region
        $region41: #{_mlp_pallas_call.1} parent=39 // pred_check
          %p269 = pneg %p84
        $region42: #{_mlp_pallas_call.1} parent=39 // pred_check_branch
          %271 = sbr.rel (%p269) target = $region44
        $region43: #{_mlp_pallas_call.1} parent=39 // pred_region
          %272 = dma.done [#allocation3], 2048
        $region44: #{_mlp_pallas_call.1} parent=39 // pred_fallthru
          _
        // Predicated region
        $region45: #{_mlp_pallas_call.1} parent=39 // pred_check
          %p273 = pneg %p138
        $region46: #{_mlp_pallas_call.1} parent=39 // pred_check_branch
          %275 = sbr.rel (%p273) target = $region48
        $region47: #{_mlp_pallas_call.1} parent=39 // pred_region
          %276 = dma.done [#allocation5], 2048
        $region48: #{_mlp_pallas_call.1} parent=39 // pred_fallthru
          _
        %p277 = scmp.lt.s32.totalorder %s23, 1
        %s278 = scalar_select %p277, %s23, 1
        %s279 = smul.addr %s278, 8
        %s280 = scalar_lea.vmem %s0, %s279
        %p281 = pneg %p58
        %p282 = pneg %p55
        %p283 = pneg %p84
        %p284 = pneg %p81
        %p285 = scmp.lt.s32.totalorder %s25, 0
        %s286 = scalar_select %p285, %s25, 0
        %s287 = scalar_lea.vmem %s2, %s286
        %p288 = pneg %p110
        %p289 = pneg %p107
        %p290 = pneg %p138
        %p291 = pneg %p135
        %p292 = scmp.lt.s32.totalorder %s24, 0
        %s293 = scalar_select %p292, %s24, 0
        %s294 = scalar_lea.vmem %s4, %s293
        %p295 = pneg %p164
        %p296 = pneg %p161
        %p297 = pneg %p192
        %p298 = pneg %p189
        %p299 = scmp.lt.s32.totalorder %s23, 1
        %s300 = scalar_select %p299, %s23, 1
        %p301 = scmp.lt.s32.totalorder %s24, 0
        %s302 = scalar_select %p301, %s24, 0
        %s303 = sadd.s32 %s302, %s300
        %s304 = smul.addr %s303, 8
        %s305 = scalar_lea.vmem %s5, %s304
        %p306 = scmp.lt.s32.totalorder %s23, 1
        %s307 = scalar_select %p306, %s23, 1
        %s308 = smul.addr %s307, 8
        %s309 = scalar_lea.vmem %s0, %s308
        %p310 = scmp.lt.s32.totalorder %s25, 0
        %s311 = scalar_select %p310, %s25, 0
        %s312 = scalar_lea.vmem %s2, %s311
        %s313 = smul.u32 16, %s25
        %p314 = scmp.lt.s32.totalorder %s24, 0
        %s315 = scalar_select %p314, %s24, 0
        %s316 = scalar_lea.vmem %s4, %s315
        %p317 = scmp.lt.s32.totalorder %s23, 1
        %s318 = scalar_select %p317, %s23, 1
        %p319 = scmp.lt.s32.totalorder %s24, 0
        %s320 = scalar_select %p319, %s24, 0
        %s321 = sadd.s32 %s320, %s318
        %s322 = smul.addr %s321, 8
        %s323 = scalar_lea.vmem %s5, %s322
        %p324 = scmp.eq.s32.totalorder %s25, 0
        // Predicated region
        $region49: #{_mlp_pallas_call.1} parent=39 // pred_check
          %p325 = pneg %p324
        $region50: #{_mlp_pallas_call.1} parent=39 // pred_check_branch
          %327 = sbr.rel (%p325) target = $region52
        $region51: #{_mlp_pallas_call.1} parent=39 // pred_region
          %328 = vst [vmem:[%s323] sm:$0xff] 0.0
        $region52: #{_mlp_pallas_call.1} parent=39 // pred_fallthru
          _
        %v329 = vld [vmem:[%s309] sm:$0xff]
        %v330 = vld [vmem:[#allocation2] sm:$0xff]
        %v331 = vld [vmem:[#allocation2 + $0x8] sm:$0xff]
        %v332 = vld [vmem:[#allocation2 + $0x10] sm:$0xff]
        %v333 = vld [vmem:[#allocation2 + $0x18] sm:$0xff]
        %v334 = vld [vmem:[#allocation2 + $0x20] sm:$0xff]
        %v335 = vld [vmem:[#allocation2 + $0x28] sm:$0xff]
        %v336 = vld [vmem:[#allocation2 + $0x30] sm:$0xff]
        %v337 = vld [vmem:[#allocation2 + $0x38] sm:$0xff]
        %v338 = vld [vmem:[#allocation2 + $0x40] sm:$0xff]
        %v339 = vld [vmem:[#allocation2 + $0x48] sm:$0xff]
        %v340 = vld [vmem:[#allocation2 + $0x50] sm:$0xff]
        %v341 = vld [vmem:[#allocation2 + $0x58] sm:$0xff]
        %v342 = vld [vmem:[#allocation2 + $0x60] sm:$0xff]
        %v343 = vld [vmem:[#allocation2 + $0x68] sm:$0xff]
        %v344 = vld [vmem:[#allocation2 + $0x70] sm:$0xff]
        %v345 = vld [vmem:[#allocation2 + $0x78] sm:$0xff]
        %v346 = vld [vmem:[%s312] sm:$0x1]
        %v348 = vlaneseq
        %v349 = vshrl.u32 %v348, 7
        %v350 = vsub.s32 0, %v349
        %v351 = vrot.slane %v346, %v350
        %353 = vmatprep.subr.mxu0 0.0
        %354 = vmatpush1.msra.mxu0 %v345
        %355 = vmatprep.subr.mxu0 0.0
        %356 = vmatpush1.msra.mxu0 %v344
        %357 = vmatprep.subr.mxu0 0.0
        %358 = vmatpush1.msra.mxu0 %v343
        %359 = vmatprep.subr.mxu0 0.0
        %360 = vmatpush1.msra.mxu0 %v342
        %361 = vmatprep.subr.mxu0 0.0
        %362 = vmatpush1.msra.mxu0 %v341
        %363 = vmatprep.subr.mxu0 0.0
        %364 = vmatpush1.msra.mxu0 %v340
        %365 = vmatprep.subr.mxu0 0.0
        %366 = vmatpush1.msra.mxu0 %v339
        %367 = vmatprep.subr.mxu0 0.0
        %368 = vmatpush1.msra.mxu0 %v338
        %369 = vmatprep.subr.mxu0 0.0
        %370 = vmatpush1.msra.mxu0 %v337
        %371 = vmatprep.subr.mxu0 0.0
        %372 = vmatpush1.msra.mxu0 %v336
        %373 = vmatprep.subr.mxu0 0.0
        %374 = vmatpush1.msra.mxu0 %v335
        %375 = vmatprep.subr.mxu0 0.0
        %376 = vmatpush1.msra.mxu0 %v334
        %377 = vmatprep.subr.mxu0 0.0
        %378 = vmatpush1.msra.mxu0 %v333
        %379 = vmatprep.subr.mxu0 0.0
        %380 = vmatpush1.msra.mxu0 %v332
        %381 = vmatprep.subr.mxu0 0.0
        %382 = vmatpush1.msra.mxu0 %v331
        %383 = vmatprep.subr.mxu0 0.0
        %384 = vmatpush1.msra.mxu0 %v330
        %385 = vmatprep.subr.mxu0 0.0
        %386 = vmatpush2.msra.mxu0 0.0
        %387 = vmatprep.subr.mxu0 0.0
        %388 = vmatpush2.msra.mxu0 0.0
        %389 = vmatprep.subr.mxu0 0.0
        %390 = vmatpush2.msra.mxu0 0.0
        %391 = vmatprep.subr.mxu0 0.0
        %392 = vmatpush2.msra.mxu0 0.0
        %393 = vmatprep.subr.mxu0 0.0
        %394 = vmatpush2.msra.mxu0 0.0
        %395 = vmatprep.subr.mxu0 0.0
        %396 = vmatpush2.msra.mxu0 0.0
        %397 = vmatprep.subr.mxu0 0.0
        %398 = vmatpush2.msra.mxu0 0.0
        %399 = vmatprep.subr.mxu0 0.0
        %400 = vmatpush2.msra.mxu0 0.0
        %401 = vmatprep.subr.mxu0 0.0
        %402 = vmatpush2.msra.mxu0 0.0
        %403 = vmatprep.subr.mxu0 0.0
        %404 = vmatpush2.msra.mxu0 0.0
        %405 = vmatprep.subr.mxu0 0.0
        %406 = vmatpush2.msra.mxu0 0.0
        %407 = vmatprep.subr.mxu0 0.0
        %408 = vmatpush2.msra.mxu0 0.0
        %409 = vmatprep.subr.mxu0 0.0
        %410 = vmatpush2.msra.mxu0 0.0
        %411 = vmatprep.subr.mxu0 0.0
        %412 = vmatpush2.msra.mxu0 0.0
        %413 = vmatprep.subr.mxu0 0.0
        %414 = vmatpush2.msra.mxu0 0.0
        %415 = vmatprep.subr.mxu0 0.0
        %416 = vmatpush2.msra.mxu0 0.0
        %417 = vmatprep.mubr.f32.mxu0 0.0
        %418 = vmatmul.mubr.f32.gmra.mxu0 %v329
        %v419 = vpop.f32.mrf.mxu0
        %v420 = vadd.f32 %v351, %v419
        %v421 = vpop.f32.mrf.mxu0
        %422 = vdwg.mxu0
        %v423 = vmul.f32 %v420, 0.5
        %v424 = vmul.f32 %v420, 0.70710677
        %v425 = verf.f32.pop %v424
        %v426 = vadd.f32 %v425, 1.0
        %v427 = vmul.f32 %v423, %v426
        %v428 = vld [vmem:[%s323] sm:$0xff]
        %v429 = vld [vmem:[#allocation4] sm:$0xff]
        %v430 = vld [vmem:[#allocation4 + $0x8] sm:$0xff]
        %v431 = vld [vmem:[#allocation4 + $0x10] sm:$0xff]
        %v432 = vld [vmem:[#allocation4 + $0x18] sm:$0xff]
        %v433 = vld [vmem:[#allocation4 + $0x20] sm:$0xff]
        %v434 = vld [vmem:[#allocation4 + $0x28] sm:$0xff]
        %v435 = vld [vmem:[#allocation4 + $0x30] sm:$0xff]
        %v436 = vld [vmem:[#allocation4 + $0x38] sm:$0xff]
        %v437 = vld [vmem:[#allocation4 + $0x40] sm:$0xff]
        %v438 = vld [vmem:[#allocation4 + $0x48] sm:$0xff]
        %v439 = vld [vmem:[#allocation4 + $0x50] sm:$0xff]
        %v440 = vld [vmem:[#allocation4 + $0x58] sm:$0xff]
        %v441 = vld [vmem:[#allocation4 + $0x60] sm:$0xff]
        %v442 = vld [vmem:[#allocation4 + $0x68] sm:$0xff]
        %v443 = vld [vmem:[#allocation4 + $0x70] sm:$0xff]
        %v444 = vld [vmem:[#allocation4 + $0x78] sm:$0xff]
        %445 = vmatprep.subr.mxu0 0.0
        %446 = vmatpush1.msra.mxu0 %v444
        %447 = vmatprep.subr.mxu0 0.0
        %448 = vmatpush1.msra.mxu0 %v443
        %449 = vmatprep.subr.mxu0 0.0
        %450 = vmatpush1.msra.mxu0 %v442
        %451 = vmatprep.subr.mxu0 0.0
        %452 = vmatpush1.msra.mxu0 %v441
        %453 = vmatprep.subr.mxu0 0.0
        %454 = vmatpush1.msra.mxu0 %v440
        %455 = vmatprep.subr.mxu0 0.0
        %456 = vmatpush1.msra.mxu0 %v439
        %457 = vmatprep.subr.mxu0 0.0
        %458 = vmatpush1.msra.mxu0 %v438
        %459 = vmatprep.subr.mxu0 0.0
        %460 = vmatpush1.msra.mxu0 %v437
        %461 = vmatprep.subr.mxu0 0.0
        %462 = vmatpush1.msra.mxu0 %v436
        %463 = vmatprep.subr.mxu0 0.0
        %464 = vmatpush1.msra.mxu0 %v435
        %465 = vmatprep.subr.mxu0 0.0
        %466 = vmatpush1.msra.mxu0 %v434
        %467 = vmatprep.subr.mxu0 0.0
        %468 = vmatpush1.msra.mxu0 %v433
        %469 = vmatprep.subr.mxu0 0.0
        %470 = vmatpush1.msra.mxu0 %v432
        %471 = vmatprep.subr.mxu0 0.0
        %472 = vmatpush1.msra.mxu0 %v431
        %473 = vmatprep.subr.mxu0 0.0
        %474 = vmatpush1.msra.mxu0 %v430
        %475 = vmatprep.subr.mxu0 0.0
        %476 = vmatpush1.msra.mxu0 %v429
        %477 = vmatprep.subr.mxu0 0.0
        %478 = vmatpush2.msra.mxu0 0.0
        %479 = vmatprep.subr.mxu0 0.0
        %480 = vmatpush2.msra.mxu0 0.0
        %481 = vmatprep.subr.mxu0 0.0
        %482 = vmatpush2.msra.mxu0 0.0
        %483 = vmatprep.subr.mxu0 0.0
        %484 = vmatpush2.msra.mxu0 0.0
        %485 = vmatprep.subr.mxu0 0.0
        %486 = vmatpush2.msra.mxu0 0.0
        %487 = vmatprep.subr.mxu0 0.0
        %488 = vmatpush2.msra.mxu0 0.0
        %489 = vmatprep.subr.mxu0 0.0
        %490 = vmatpush2.msra.mxu0 0.0
        %491 = vmatprep.subr.mxu0 0.0
        %492 = vmatpush2.msra.mxu0 0.0
        %493 = vmatprep.subr.mxu0 0.0
        %494 = vmatpush2.msra.mxu0 0.0
        %495 = vmatprep.subr.mxu0 0.0
        %496 = vmatpush2.msra.mxu0 0.0
        %497 = vmatprep.subr.mxu0 0.0
        %498 = vmatpush2.msra.mxu0 0.0
        %499 = vmatprep.subr.mxu0 0.0
        %500 = vmatpush2.msra.mxu0 0.0
        %501 = vmatprep.subr.mxu0 0.0
        %502 = vmatpush2.msra.mxu0 0.0
        %503 = vmatprep.subr.mxu0 0.0
        %504 = vmatpush2.msra.mxu0 0.0
        %505 = vmatprep.subr.mxu0 0.0
        %506 = vmatpush2.msra.mxu0 0.0
        %507 = vmatprep.subr.mxu0 0.0
        %508 = vmatpush2.msra.mxu0 0.0
        %509 = vmatprep.mubr.f32.mxu0 0.0
        %510 = vmatmul.mubr.f32.gmra.mxu0 %v427
        %v511 = vpop.f32.mrf.mxu0
        %v512 = vadd.f32 0.0, %v511
        %v513 = vpop.f32.mrf.mxu0
        %514 = vdwg.mxu0
        %v515 = vadd.f32 %v428, %v512
        %516 = vst [vmem:[%s323] sm:$0xff] %v515
        // Predicated region
        $region53: #{_mlp_pallas_call.1} parent=39 // pred_check
          %p517 = pneg %p324
        $region54: #{_mlp_pallas_call.1} parent=39 // pred_check_branch
          %519 = sbr.rel (%p517) target = $region56
        $region55: #{_mlp_pallas_call.1} parent=39 // pred_region
          %v520 = vld [vmem:[%s316] sm:$0x1]
          %v521 = vld [vmem:[%s323] sm:$0xff]
          %v523 = vlaneseq
          %v524 = vshrl.u32 %v523, 7
          %v525 = vsub.s32 0, %v524
          %v526 = vrot.slane %v520, %v525
          %v528 = vadd.f32 %v521, %v526
          %529 = vst [vmem:[%s323] sm:$0xff] %v528
        $region56: #{_mlp_pallas_call.1} parent=39 // pred_fallthru
          _
        %p530 = scmp.lt.s32.totalorder %s23, 1
        %s531 = scalar_select %p530, %s23, 1
        %p532 = scmp.lt.s32.totalorder %s24, 0
        %s533 = scalar_select %p532, %s24, 0
        %s534 = sadd.s32 %s533, %s531
        %s535 = smul.addr %s534, 8
        %s536 = scalar_lea.vmem %s5, %s535
        // Predicated region
        $region57: #{_mlp_pallas_call.1} parent=39 // pred_check
          %p537 = pneg %p189
        $region58: #{_mlp_pallas_call.1} parent=39 // pred_check_branch
          %539 = sbr.rel (%p537) target = $region60
        $region59: #{_mlp_pallas_call.1} parent=39 // pred_region
          _
        $region60: #{_mlp_pallas_call.1} parent=39 // pred_fallthru
          _
      $region40: #{_mlp_pallas_call.1} parent=5 // pred_fallthru
        _
      %p540 = scmp.le.s32.totalorder 2, %s13
      // Predicated region
      $region61: #{_mlp_pallas_call.1} parent=5 // pred_check
        %p541 = pneg %p540
      $region62: #{_mlp_pallas_call.1} parent=5 // pred_check_branch
        %543 = sbr.rel (%p541) target = $region64
      $region63: #{_mlp_pallas_call.1} parent=5 // pred_region
        %s544 = ssub.s32 %s13, 2
        // Predicated region
        $region65: #{_mlp_pallas_call.1} parent=63 // pred_check
          %p545 = pneg %p195
        $region66: #{_mlp_pallas_call.1} parent=63 // pred_check_branch
          %547 = sbr.rel (%p545) target = $region68
        $region67: #{_mlp_pallas_call.1} parent=63 // pred_region
          %p548 = scmp.lt.s32.totalorder %s26, 1
          %s549 = scalar_select %p548, %s26, 1
          %p550 = scmp.lt.s32.totalorder %s27, 0
          %s551 = scalar_select %p550, %s27, 0
          %s552 = sadd.s32 %s551, %s549
          %s553 = smul.addr %s552, 8
          %s554 = scalar_lea.vmem %s5, %s553
        $region68: #{_mlp_pallas_call.1} parent=63 // pred_fallthru
          _
      $region64: #{_mlp_pallas_call.1} parent=5 // pred_fallthru
        _
    $region6: #{_mlp_pallas_call.1} parent=1 // loop_footer
      %s17 = sadd.s32 1, %s13
    $region7: #{_mlp_pallas_call.1} parent=1 // loop_footer_branch
      %12 = sbr.rel target = $region3
    $region8: #{_mlp_pallas_call.1} parent=1 // loop_exit
      _
    %555 = vsyncpa [#allocation3], 1
    %s556 = scalar_lea.sflag [#allocation3], 1
    %557 = vsyncpa %s556, 1
    %558 = vsyncpa [#allocation5], 1

</llo_original>
